<compile_context>
chip_gen: v5e
topology: v5e:2x2
jax: 0.10.0
libtpu: 0.0.40
codegen_flags: <defaults>
</compile_context>

<pallas_src>
import jax
import jax.numpy as jnp
from jax.experimental import pallas as pl
from jax.experimental.pallas import tpu as pltpu


def _two_view_kernel(x_ref, p_ref, o1_ref, o2_ref):
    # x_ref : (R_TILE, L_TILE)  lane-dense input tile
    # p_ref : (R_TILE, 4)       packed per-row params [s1, b1, s2, b2]
    # o*_ref: (R_TILE, L_TILE)
    x = x_ref[...].astype(jnp.float32)
    p = p_ref[...]
    s1 = p[:, 0:1]
    b1 = p[:, 1:2]
    s2 = p[:, 2:3]
    b2 = p[:, 3:4]
    o1_ref[...] = (x * s1 + b1).astype(o1_ref.dtype)
    o2_ref[...] = (x * s2 + b2).astype(o2_ref.dtype)


_TARGET_BLOCK_BYTES = 2 * 1024 * 1024   # ~2 MiB per f32 data block
_MAX_ROW_TILE = 512                     # multiple of 8 (sublane unit)
_LANE_TILE = 1024                       # multiple of 128 (lane unit)
_ITEMSIZE = 4                           # f32


def _choose_tiles(m, l):
    """Robust tile selection: cap at a target block size; never fall back to a
    huge full-dimension block.  Remainders are handled by pl.cdiv + Pallas
    edge masking, so tiles need not divide the array dims exactly."""
    if l * 8 * _ITEMSIZE <= 2 * _TARGET_BLOCK_BYTES:
        # Case A: full-row blocks -> one fully contiguous HBM region per DMA.
        l_tile = l  # full lane extent: legal even when not 128-aligned
        rows_budget = max(8, (_TARGET_BLOCK_BYTES // (l * _ITEMSIZE)) // 8 * 8)
        r_tile = min(_MAX_ROW_TILE, rows_budget)
        if m <= r_tile:
            r_tile = m          # full dim -> always a legal block extent
    else:
        # Case B: very wide rows -> tile the lane axis at a 128-multiple cap.
        l_tile = _LANE_TILE
        r_tile = _MAX_ROW_TILE if m > _MAX_ROW_TILE else m
    return r_tile, l_tile


def two_view_collate(batch_images, mean1, std1, mean2, std2):
    """batch_images: (N, C, H, W) float32.
    mean*/std*: (C,) float32 per-channel normalization parameters.
    Returns ((view1, view2), None) matching the PyTorch module's output."""
    n, c, h, w = batch_images.shape
    m = n * c
    l = h * w

    # Free reshape (row-major NCHW): each row is one (image, channel) plane.
    x2d = batch_images.reshape(m, l)

    # Fold (x - mean)/std -> x*s + b and pack [s1,b1,s2,b2] into one (m,4)
    # array: 1 param DMA per row tile instead of 4, ~4x less padded VMEM.
    inv1 = (1.0 / std1).astype(jnp.float32)
    inv2 = (1.0 / std2).astype(jnp.float32)
    per_c = jnp.stack(
        [inv1,
         -mean1.astype(jnp.float32) * inv1,
         inv2,
         -mean2.astype(jnp.float32) * inv2],
        axis=-1)                                  # (C, 4)
    params = jnp.tile(per_c, (n, 1))              # (N*C, 4), row r -> channel r % C

    r_tile, l_tile = _choose_tiles(m, l)
    grid = (pl.cdiv(m, r_tile), pl.cdiv(l, l_tile))

    data_spec = pl.BlockSpec((r_tile, l_tile), lambda i, j: (i, j))
    # Param block index is independent of the inner lane axis j, so Pallas does
    # not re-DMA it on every inner grid step.
    param_spec = pl.BlockSpec((r_tile, 4), lambda i, j: (i, 0))

    out_shape = jax.ShapeDtypeStruct((m, l), batch_images.dtype)

    grid_spec = pltpu.PrefetchScalarGridSpec(
        num_scalar_prefetch=0,
        grid=grid,
        in_specs=[data_spec, param_spec],
        out_specs=[data_spec, data_spec],
    )

    view1, view2 = pl.pallas_call(
        _two_view_kernel,
        out_shape=(out_shape, out_shape),
        grid_spec=grid_spec,
        compiler_params=pltpu.CompilerParams(
            dimension_semantics=("parallel", "parallel"),
            vmem_limit_bytes=48 * 1024 * 1024),
    )(x2d, params)

    view1 = view1.reshape(n, c, h, w)
    view2 = view2.reshape(n, c, h, w)

    # TODO(synk): arbitrary user-supplied transform callables cannot be
    # expressed generically; a deterministic per-channel affine transform is
    # used for both views instead.
    return (view1, view2), None


if __name__ == "__main__":
    key = jax.random.PRNGKey(0)
    N, C, H, W = 2, 4, 16, 16
    x = jax.random.normal(key, (N, C, H, W), dtype=jnp.float32)

    # Deterministic transform parameters (per-channel mean / std).
    mean1 = jnp.linspace(-0.5, 0.5, C, dtype=jnp.float32)
    std1 = jnp.linspace(0.5, 1.5, C, dtype=jnp.float32)
    mean2 = jnp.linspace(0.1, 0.4, C, dtype=jnp.float32)
    std2 = jnp.linspace(1.0, 2.0, C, dtype=jnp.float32)

    (v1, v2), extra = two_view_collate(x, mean1, std1, mean2, std2)
    jax.block_until_ready((v1, v2))

    # Reference check in plain JAX.
    ref1 = (x - mean1[None, :, None, None]) / std1[None, :, None, None]
    ref2 = (x - mean2[None, :, None, None]) / std2[None, :, None, None]
    assert jnp.allclose(v1, ref1, atol=1e-5), "view1 mismatch"
    assert jnp.allclose(v2, ref2, atol=1e-5), "view2 mismatch"
    assert extra is None
    assert v1.shape == (N, C, H, W) and v2.shape == (N, C, H, W)

    print("KERNEL_OK")
</pallas_src>

<mosaic_0001>
module attributes {stable_mosaic.version = 11 : i64} {
  func.func @_two_view_kernel(%arg0: i32, %arg1: i32, %arg2: memref<8x256xf32, #tpu.memory_space<vmem>>, %arg3: memref<8x4xf32, #tpu.memory_space<vmem>>, %arg4: memref<8x256xf32, #tpu.memory_space<vmem>>, %arg5: memref<8x256xf32, #tpu.memory_space<vmem>>) attributes {dimension_semantics = [#tpu.dimension_semantics<parallel>, #tpu.dimension_semantics<parallel>], iteration_bounds = array<i64: 1, 1>, scalar_prefetch = 0 : i64, scratch_operands = 0 : i64, tpu.core_type = #tpu.core_type<tc>, window_params = [{transform_indices = @transform_0, window_bounds = array<i64: 8, 256>}, {transform_indices = @transform_1, window_bounds = array<i64: 8, 4>}, {transform_indices = @transform_2, window_bounds = array<i64: 8, 256>}, {transform_indices = @transform_3, window_bounds = array<i64: 8, 256>}]} {
    %c0 = arith.constant 0 : index
    %c0_0 = arith.constant 0 : index
    %0 = vector.load %arg2[%c0, %c0_0] : memref<8x256xf32, #tpu.memory_space<vmem>>, vector<8x256xf32>
    %c0_1 = arith.constant 0 : index
    %c0_2 = arith.constant 0 : index
    %1 = vector.load %arg3[%c0_1, %c0_2] : memref<8x4xf32, #tpu.memory_space<vmem>>, vector<8x4xf32>
    %2 = vector.extract_strided_slice %1 {offsets = [0, 0], sizes = [8, 1], strides = [1, 1]} : vector<8x4xf32> to vector<8x1xf32>
    %3 = vector.extract_strided_slice %1 {offsets = [0, 1], sizes = [8, 1], strides = [1, 1]} : vector<8x4xf32> to vector<8x1xf32>
    %4 = vector.extract_strided_slice %1 {offsets = [0, 2], sizes = [8, 1], strides = [1, 1]} : vector<8x4xf32> to vector<8x1xf32>
    %5 = vector.extract_strided_slice %1 {offsets = [0, 3], sizes = [8, 1], strides = [1, 1]} : vector<8x4xf32> to vector<8x1xf32>
    %6 = vector.broadcast %2 : vector<8x1xf32> to vector<8x256xf32>
    %7 = arith.mulf %0, %6 : vector<8x256xf32>
    %8 = vector.broadcast %3 : vector<8x1xf32> to vector<8x256xf32>
    %9 = arith.addf %7, %8 : vector<8x256xf32>
    %c0_3 = arith.constant 0 : index
    %c0_4 = arith.constant 0 : index
    %10 = vector.load %arg4[%c0_3, %c0_4] : memref<8x256xf32, #tpu.memory_space<vmem>>, vector<8x256xf32>
    tpu.vector_store %arg4[%c0_3, %c0_4], %9 {strides = array<i32>} : memref<8x256xf32, #tpu.memory_space<vmem>>, vector<8x256xf32>,
    %11 = vector.broadcast %4 : vector<8x1xf32> to vector<8x256xf32>
    %12 = arith.mulf %0, %11 : vector<8x256xf32>
    %13 = vector.broadcast %5 : vector<8x1xf32> to vector<8x256xf32>
    %14 = arith.addf %12, %13 : vector<8x256xf32>
    %c0_5 = arith.constant 0 : index
    %c0_6 = arith.constant 0 : index
    %15 = vector.load %arg5[%c0_5, %c0_6] : memref<8x256xf32, #tpu.memory_space<vmem>>, vector<8x256xf32>
    tpu.vector_store %arg5[%c0_5, %c0_6], %14 {strides = array<i32>} : memref<8x256xf32, #tpu.memory_space<vmem>>, vector<8x256xf32>,
    return
  }
  func.func @transform_0(%arg0: i32, %arg1: i32) -> (i32, i32) {
    %c0_i32 = arith.constant 0 : i32
    return %arg0, %arg1 : i32, i32
  }
  func.func @transform_1(%arg0: i32, %arg1: i32) -> (i32, i32) {
    %c0_i32 = arith.constant 0 : i32
    %c0_i32_0 = arith.constant 0 : i32
    return %arg0, %c0_i32 : i32, i32
  }
  func.func @transform_2(%arg0: i32, %arg1: i32) -> (i32, i32) {
    %c0_i32 = arith.constant 0 : i32
    return %arg0, %arg1 : i32, i32
  }
  func.func @transform_3(%arg0: i32, %arg1: i32) -> (i32, i32) {
    %c0_i32 = arith.constant 0 : i32
    return %arg0, %arg1 : i32, i32
  }
}

</mosaic_0001>

<llo_original>
// kernel: tpu_custom_call.1
$region0: #{tpu_custom_call.1}
  #allocation0 [shape = 'u32[]', space=smem, size = 0x4, offset = 0x4, fixed_abs, tag = 'smem constant byte address 0x4 - core index']
  #allocation1 [shape = 'u32[72,128]{1,0:T(1,128)}', space=vmem, size = 0x9000, scoped, tag = 'internal scratch']
  %s0 = inlined_call_operand.hbm [shape: f32[8,256], index: 0, kind: input, shape index: {}]
  %s1 = inlined_call_operand.vmem [shape: f32[8,4], index: 1, kind: input, shape index: {}]
  %s2 = inlined_call_operand.hbm [shape: f32[8,256], index: 2, kind: output, shape index: {0}]
  %s3 = inlined_call_operand.hbm [shape: f32[8,256], index: 3, kind: output, shape index: {1}]
  %4 = xla_tuple %s2, %s3
  %s5 = sld [smem:[#allocation0]]
  $region30: #{tpu_custom_call.1} parent=0
    _
  %s7 = ssub.s32 1, %s5
  %s8 = scalar_select 0, %s7, %s5
  $region1: #{tpu_custom_call.1} parent=0
    #allocation2 [shape = 'u8[8192]{0}', space=vmem, size = 0x2000, scoped, tag = 'input window, operand 0, single buffered']
    #allocation3 [shape = 's32[1]{0}', space=sflag, size = 0x4, scoped, tag = 'scoped memory for tpu_custom_call.1']
    #allocation4 [shape = 's32[1]{0}', space=sflag, size = 0x4, scoped, tag = 'scoped memory for tpu_custom_call.1']
    #allocation5 [shape = 'u8[8192]{0}', space=vmem, size = 0x2000, scoped, tag = 'output window, operand 0, single buffered']
    #allocation6 [shape = 'u8[8192]{0}', space=vmem, size = 0x2000, scoped, tag = 'output window, operand 1, single buffered']
    #allocation7 [shape = 's32[1]{0}', space=sflag, size = 0x4, scoped, tag = 'scoped memory for tpu_custom_call.1']
    %9 = vsyncpa [#allocation3], 0
    %10 = vsyncpa [#allocation4], 0
    %11 = vsyncpa [#allocation7], 0
    // Predicated region
    $region2: #{tpu_custom_call.1} parent=1 // pred_check
      _
    $region3: #{tpu_custom_call.1} parent=1 // pred_check_branch
      %13 = sbr.rel (0) target = $region5
    $region4: #{tpu_custom_call.1} parent=1 // pred_region
      %15 = vsyncadd [#allocation3], 0
      %s17 = sshll.u32 %s0, 4
      %s18 = int_to_ptr.hbm [resolvable:$true] %s17
      %s19 = sshll.u32 [#allocation2], 4
      %s20 = int_to_ptr.vmem [resolvable:$true] %s19
      %22 = dma.hbm_to_vmem [thread:$0]  %s18, 256, %s20, [#allocation3]
    $region5: #{tpu_custom_call.1} parent=1 // pred_fallthru
      _
    // Predicated region
    $region6: #{tpu_custom_call.1} parent=1 // pred_check
      _
    $region7: #{tpu_custom_call.1} parent=1 // pred_check_branch
      %24 = sbr.rel (0) target = $region9
    $region8: #{tpu_custom_call.1} parent=1 // pred_region
      _
    $region9: #{tpu_custom_call.1} parent=1 // pred_fallthru
      _
    // Predicated region
    $region10: #{tpu_custom_call.1} parent=1 // pred_check
      _
    $region11: #{tpu_custom_call.1} parent=1 // pred_check_branch
      %26 = sbr.rel (0) target = $region13
    $region12: #{tpu_custom_call.1} parent=1 // pred_region
      %28 = dma.done [#allocation3], 256
    $region13: #{tpu_custom_call.1} parent=1 // pred_fallthru
      _
    %v29 = vld [vmem:[#allocation2] sm:$0xff]
    %v30 = vld [vmem:[#allocation2 + $0x8] sm:$0xff]
    %v31 = vld [vmem:[%s1] sm:$0xff]
    %33 = vset.pattern.permute.xlu0 0
    %34 = vperm.xlu0 %33, %v31
    %v35 = vpop.permute.xlu0 %34
    %v37 = vmul.f32 %v29, %v35
    %v38 = vmul.f32 %v30, %v35
    %39 = vset.pattern.permute.xlu0 1
    %40 = vperm.xlu0 %39, %v31
    %v41 = vpop.permute.xlu0 %40
    %v43 = vadd.f32 %v37, %v41
    %v44 = vadd.f32 %v38, %v41
    %45 = vst [vmem:[#allocation5] sm:$0xff] %v43
    %46 = vst [vmem:[#allocation5 + $0x8] sm:$0xff] %v44
    %47 = vset.pattern.permute.xlu0 2
    %48 = vperm.xlu0 %47, %v31
    %v49 = vpop.permute.xlu0 %48
    %v51 = vmul.f32 %v29, %v49
    %v52 = vmul.f32 %v30, %v49
    %53 = vset.pattern.permute.xlu0 3
    %54 = vperm.xlu0 %53, %v31
    %v55 = vpop.permute.xlu0 %54
    %v57 = vadd.f32 %v51, %v55
    %v58 = vadd.f32 %v52, %v55
    %59 = vst [vmem:[#allocation6] sm:$0xff] %v57
    %60 = vst [vmem:[#allocation6 + $0x8] sm:$0xff] %v58
    // Predicated region
    $region14: #{tpu_custom_call.1} parent=1 // pred_check
      _
    $region15: #{tpu_custom_call.1} parent=1 // pred_check_branch
      %62 = sbr.rel (0) target = $region17
    $region16: #{tpu_custom_call.1} parent=1 // pred_region
      %64 = vsyncadd [#allocation4], 0
      %s66 = sshll.u32 [#allocation5], 4
      %s67 = int_to_ptr.vmem [resolvable:$true] %s66
      %s68 = sshll.u32 %s2, 4
      %s69 = int_to_ptr.hbm [resolvable:$true] %s68
      %71 = dma.vmem_to_hbm [thread:$0]  %s67, 256, %s69, [#allocation4]
    $region17: #{tpu_custom_call.1} parent=1 // pred_fallthru
      _
    // Predicated region
    $region18: #{tpu_custom_call.1} parent=1 // pred_check
      _
    $region19: #{tpu_custom_call.1} parent=1 // pred_check_branch
      %73 = sbr.rel (0) target = $region21
    $region20: #{tpu_custom_call.1} parent=1 // pred_region
      %75 = vsyncadd [#allocation7], 0
      %s77 = sshll.u32 [#allocation6], 4
      %s78 = int_to_ptr.vmem [resolvable:$true] %s77
      %s79 = sshll.u32 %s3, 4
      %s80 = int_to_ptr.hbm [resolvable:$true] %s79
      %82 = dma.vmem_to_hbm [thread:$0]  %s78, 256, %s80, [#allocation7]
    $region21: #{tpu_custom_call.1} parent=1 // pred_fallthru
      _
    // Predicated region
    $region22: #{tpu_custom_call.1} parent=1 // pred_check
      _
    $region23: #{tpu_custom_call.1} parent=1 // pred_check_branch
      %84 = sbr.rel (0) target = $region25
    $region24: #{tpu_custom_call.1} parent=1 // pred_region
      %86 = dma.done [#allocation4], 256
    $region25: #{tpu_custom_call.1} parent=1 // pred_fallthru
      _
    // Predicated region
    $region26: #{tpu_custom_call.1} parent=1 // pred_check
      _
    $region27: #{tpu_custom_call.1} parent=1 // pred_check_branch
      %88 = sbr.rel (0) target = $region29
    $region28: #{tpu_custom_call.1} parent=1 // pred_region
      %90 = dma.done [#allocation7], 256
    $region29: #{tpu_custom_call.1} parent=1 // pred_fallthru
      _
    %91 = vsyncpa [#allocation3], 1
    %92 = vsyncpa [#allocation4], 1
    %93 = vsyncpa [#allocation7], 1

</llo_original>
